<compile_context>
chip_gen: v7x
topology: tpu7x:2x2x1
jax: 0.10.0
libtpu: 0.0.40
codegen_flags: <defaults>
</compile_context>

<pallas_src>
import functools
import math

import jax
import jax.numpy as jnp
from jax.experimental import pallas as pl
from jax.experimental.pallas import tpu as pltpu

LANE = 128     # lane width: only the final output slab is padded to this
SUBLANE = 16   # bf16 sublane group: pad batch to a multiple of this


def _round_up(x, m):
    return ((x + m - 1) // m) * m


def _fused_mlp_kernel(*refs, num_layers):
    """refs = (x_ref, w0_ref, b0_ref, w1_ref, b1_ref, ..., o_ref).

    Unrolled over the static layer list; the activation never leaves
    vregs/VMEM -- the only HBM write is the final lane-dense output slab.
    """
    x_ref = refs[0]
    o_ref = refs[-1]

    h = x_ref[...]                                    # (B_p, Din) f32
    for i in range(num_layers):
        w_ref = refs[1 + 2 * i]                       # (Din_i, Dout_i) bf16
        b_ref = refs[2 + 2 * i]                       # (1, Dout_i) f32
        # bf16 MXU feed, f32 accumulation.
        y = jnp.dot(h.astype(jnp.bfloat16), w_ref[...],
                    preferred_element_type=jnp.float32)
        y = y + b_ref[...]                            # f32 bias add (VPU)
        if i < num_layers - 1:
            y = jnp.clip(y, 0.0, 6.0)                 # relu6 in f32
            # dropout: identity at inference time
        h = y

    o_ref[...] = h.astype(o_ref.dtype)                # single lane-dense HBM write


def fused_discriminator_call(x_p, prepared_params):
    """Single no-grid pallas_call running the whole MLP. x_p: (B_p, Din) f32."""
    B_p, _ = x_p.shape
    num_layers = len(prepared_params)
    out_p = prepared_params[-1][0].shape[1]           # lane-dense output width

    flat_args = [x_p]
    flops = 0
    bytes_accessed = x_p.size * x_p.dtype.itemsize
    for w, b in prepared_params:
        flat_args.append(w)
        flat_args.append(b)
        flops += 2 * B_p * w.shape[0] * w.shape[1]
        bytes_accessed += w.size * w.dtype.itemsize + b.size * b.dtype.itemsize
    bytes_accessed += B_p * out_p * 4

    vmem_spec = pl.BlockSpec(memory_space=pltpu.MemorySpace.VMEM)
    kernel = functools.partial(_fused_mlp_kernel, num_layers=num_layers)

    return pl.pallas_call(
        kernel,
        out_shape=jax.ShapeDtypeStruct((B_p, out_p), jnp.float32),
        in_specs=[vmem_spec] * len(flat_args),
        out_specs=vmem_spec,
        cost_estimate=pl.CostEstimate(
            flops=flops, transcendentals=0, bytes_accessed=bytes_accessed
        ),
    )(*flat_args)


def discriminator_forward(x, prepared_params, num_classes):
    """x: (B, input_size) f32 -> (B, num_classes) f32."""
    B, _ = x.shape
    B_p = _round_up(B, SUBLANE)
    if B_p != B:
        # Only emitted when the caller did not supply a sublane-aligned batch.
        x = jnp.pad(x, ((0, B_p - B), (0, 0)))
    out_p = fused_discriminator_call(x, prepared_params)
    return out_p[:B, :num_classes]                    # cheap consumer-side view


def init_linear(key, in_features, out_features):
    """Deterministic init mirroring nn.Linear's U(-1/sqrt(in), 1/sqrt(in)).

    Weight stored as (in, out): transposed relative to PyTorch's (out, in).
    """
    kw, kb = jax.random.split(key)
    bound = 1.0 / math.sqrt(in_features)
    w = jax.random.uniform(kw, (in_features, out_features), jnp.float32,
                           minval=-bound, maxval=bound)
    b = jax.random.uniform(kb, (out_features,), jnp.float32,
                           minval=-bound, maxval=bound)
    return w, b


def prepare_params(params):
    """Weights -> bf16 at natural shapes.  Only the LAST layer's output dim is
    zero-padded to LANE so the final HBM store is lane-dense (pad cols/bias
    lanes are zero => numerically inert).  Biases stay f32, pre-shaped (1, D).
    """
    prepared = []
    last = len(params) - 1
    for i, (w, b) in enumerate(params):
        din, dout = w.shape
        if i == last:
            dout_p = _round_up(dout, LANE)
            w_full = jnp.zeros((din, dout_p), jnp.float32).at[:, :dout].set(w)
            b_full = jnp.zeros((dout_p,), jnp.float32).at[:dout].set(b)
        else:
            w_full, b_full = w, b
        prepared.append((w_full.astype(jnp.bfloat16),
                         b_full.reshape(1, -1).astype(jnp.float32)))
    return prepared


if __name__ == "__main__":
    # Small shapes consistent with the module:
    #   input_size=32, hidden_sizes=[32, 32], num_classes=2, batch=16
    # (batch chosen as a multiple of 16 so no wrapper pad op is emitted).
    batch = 16
    input_size = 32
    hidden_sizes = [32, 32]
    num_classes = 2

    key = jax.random.PRNGKey(0)
    k_x, k_p = jax.random.split(key)

    # Build parameter stack: fc1, mid_fcs..., out_fc
    dims = [input_size] + hidden_sizes + [num_classes]
    params = []
    k = k_p
    for i in range(len(dims) - 1):
        k, sub = jax.random.split(k)
        params.append(init_linear(sub, dims[i], dims[i + 1]))

    prepared_params = prepare_params(params)

    x = jax.random.normal(k_x, (batch, input_size), jnp.float32)

    out = discriminator_forward(x, prepared_params, num_classes)
    out = jax.block_until_ready(out)

    # Reference check in plain JAX (f32 params, same math, no Pallas).
    # Tolerance loosened because the kernel feeds the MXU in bf16.
    ref = x
    for i, (w, b) in enumerate(params):
        ref = ref @ w + b
        if i < len(params) - 1:
            ref = jnp.clip(ref, 0.0, 6.0)

    assert out.shape == (batch, num_classes)
    assert jnp.allclose(out, ref, atol=5e-2, rtol=5e-2), (
        f"max abs err {jnp.max(jnp.abs(out - ref))}")

    print("KERNEL_OK")
</pallas_src>

<mosaic_0001>
module attributes {stable_mosaic.version = 11 : i64} {
  func.func @_fused_mlp_kernel(%arg0: memref<16x32xf32, #tpu.memory_space<vmem>>, %arg1: memref<32x32xbf16, #tpu.memory_space<vmem>>, %arg2: memref<1x32xf32, #tpu.memory_space<vmem>>, %arg3: memref<32x32xbf16, #tpu.memory_space<vmem>>, %arg4: memref<1x32xf32, #tpu.memory_space<vmem>>, %arg5: memref<32x128xbf16, #tpu.memory_space<vmem>>, %arg6: memref<1x128xf32, #tpu.memory_space<vmem>>, %arg7: memref<16x128xf32, #tpu.memory_space<vmem>>) attributes {dimension_semantics = [], scalar_prefetch = 0 : i64, scratch_operands = 0 : i64, tpu.core_type = #tpu.core_type<tc>} {
    %c0 = arith.constant 0 : index
    %c0_0 = arith.constant 0 : index
    %0 = vector.load %arg0[%c0, %c0_0] : memref<16x32xf32, #tpu.memory_space<vmem>>, vector<16x32xf32>
    %1 = arith.truncf %0 : vector<16x32xf32> to vector<16x32xbf16>
    %c0_1 = arith.constant 0 : index
    %c0_2 = arith.constant 0 : index
    %2 = vector.load %arg1[%c0_1, %c0_2] : memref<32x32xbf16, #tpu.memory_space<vmem>>, vector<32x32xbf16>
    %cst = arith.constant dense<0.000000e+00> : vector<16x32xf32>
    %3 = tpu.matmul %1, %2, %cst {dimension_numbers = #tpu.dot_dimension_numbers<[1], [0], [0], [1], [0, 0, 1, 1], [], []>} : vector<16x32xbf16>, vector<32x32xbf16>, vector<16x32xf32> -> vector<16x32xf32>
    %c0_3 = arith.constant 0 : index
    %c0_4 = arith.constant 0 : index
    %4 = vector.load %arg2[%c0_3, %c0_4] : memref<1x32xf32, #tpu.memory_space<vmem>>, vector<1x32xf32>
    %5 = vector.broadcast %4 : vector<1x32xf32> to vector<16x32xf32>
    %6 = arith.addf %3, %5 : vector<16x32xf32>
    %cst_5 = arith.constant 0.000000e+00 : f32
    %cst_6 = arith.constant 6.000000e+00 : f32
    %7 = vector.broadcast %cst_5 : f32 to vector<16x32xf32>
    %8 = arith.maximumf %7, %6 : vector<16x32xf32>
    %9 = vector.broadcast %cst_6 : f32 to vector<16x32xf32>
    %10 = arith.minimumf %9, %8 : vector<16x32xf32>
    %11 = arith.truncf %10 : vector<16x32xf32> to vector<16x32xbf16>
    %c0_7 = arith.constant 0 : index
    %c0_8 = arith.constant 0 : index
    %12 = vector.load %arg3[%c0_7, %c0_8] : memref<32x32xbf16, #tpu.memory_space<vmem>>, vector<32x32xbf16>
    %cst_9 = arith.constant dense<0.000000e+00> : vector<16x32xf32>
    %13 = tpu.matmul %11, %12, %cst_9 {dimension_numbers = #tpu.dot_dimension_numbers<[1], [0], [0], [1], [0, 0, 1, 1], [], []>} : vector<16x32xbf16>, vector<32x32xbf16>, vector<16x32xf32> -> vector<16x32xf32>
    %c0_10 = arith.constant 0 : index
    %c0_11 = arith.constant 0 : index
    %14 = vector.load %arg4[%c0_10, %c0_11] : memref<1x32xf32, #tpu.memory_space<vmem>>, vector<1x32xf32>
    %15 = vector.broadcast %14 : vector<1x32xf32> to vector<16x32xf32>
    %16 = arith.addf %13, %15 : vector<16x32xf32>
    %cst_12 = arith.constant 0.000000e+00 : f32
    %cst_13 = arith.constant 6.000000e+00 : f32
    %17 = vector.broadcast %cst_12 : f32 to vector<16x32xf32>
    %18 = arith.maximumf %17, %16 : vector<16x32xf32>
    %19 = vector.broadcast %cst_13 : f32 to vector<16x32xf32>
    %20 = arith.minimumf %19, %18 : vector<16x32xf32>
    %21 = arith.truncf %20 : vector<16x32xf32> to vector<16x32xbf16>
    %c0_14 = arith.constant 0 : index
    %c0_15 = arith.constant 0 : index
    %22 = vector.load %arg5[%c0_14, %c0_15] : memref<32x128xbf16, #tpu.memory_space<vmem>>, vector<32x128xbf16>
    %cst_16 = arith.constant dense<0.000000e+00> : vector<16x128xf32>
    %23 = tpu.matmul %21, %22, %cst_16 {dimension_numbers = #tpu.dot_dimension_numbers<[1], [0], [0], [1], [0, 0, 1, 1], [], []>} : vector<16x32xbf16>, vector<32x128xbf16>, vector<16x128xf32> -> vector<16x128xf32>
    %c0_17 = arith.constant 0 : index
    %c0_18 = arith.constant 0 : index
    %24 = vector.load %arg6[%c0_17, %c0_18] : memref<1x128xf32, #tpu.memory_space<vmem>>, vector<1x128xf32>
    %25 = vector.broadcast %24 : vector<1x128xf32> to vector<16x128xf32>
    %26 = arith.addf %23, %25 : vector<16x128xf32>
    %c0_19 = arith.constant 0 : index
    %c0_20 = arith.constant 0 : index
    %27 = vector.load %arg7[%c0_19, %c0_20] : memref<16x128xf32, #tpu.memory_space<vmem>>, vector<16x128xf32>
    tpu.vector_store %arg7[%c0_19, %c0_20], %26 {strides = array<i32>} : memref<16x128xf32, #tpu.memory_space<vmem>>, vector<16x128xf32>,
    return
  }
}

</mosaic_0001>

<llo_original>
// kernel: tpu_custom_call.1
$region0: #{tpu_custom_call.1}
  #allocation0 [shape = 'u32[]', space=smem, size = 0x4, offset = 0x4, fixed_abs, tag = 'smem constant byte address 0x4 - core index']
  #allocation1 [shape = 'u32[144,128]{1,0:T(1,128)}', space=vmem, size = 0x12000, scoped, tag = 'internal scratch']
  %s0 = inlined_call_operand.hbm [shape: f32[16,32], index: 0, kind: input, shape index: {}]
  %s1 = inlined_call_operand.hbm [shape: bf16[32,32], index: 1, kind: input, shape index: {}]
  %s2 = inlined_call_operand.vmem [shape: f32[1,32], index: 2, kind: input, shape index: {}]
  %s3 = inlined_call_operand.hbm [shape: bf16[32,32], index: 3, kind: input, shape index: {}]
  %s4 = inlined_call_operand.vmem [shape: f32[1,32], index: 4, kind: input, shape index: {}]
  %s5 = inlined_call_operand.vmem [shape: bf16[32,128], index: 5, kind: input, shape index: {}]
  %s6 = inlined_call_operand.vmem [shape: f32[1,128], index: 6, kind: input, shape index: {}]
  %s7 = inlined_call_operand.hbm [shape: f32[16,128], index: 7, kind: output, shape index: {}]
  %s8 = sld [smem:[#allocation0]]
  $region50: #{tpu_custom_call.1} parent=0
    _
  %s10 = ssub.s32 1, %s8
  %s11 = scalar_select 0, %s10, %s8
  $region1: #{tpu_custom_call.1} parent=0
    #allocation2 [shape = 'u8[8192]{0}', space=vmem, size = 0x2000, scoped, tag = 'input window, operand 0, single buffered']
    #allocation3 [shape = 's32[1]{0}', space=sflag, size = 0x4, scoped, tag = 'scoped memory for tpu_custom_call.1']
    #allocation4 [shape = 's32[1]{0}', space=sflag, size = 0x4, scoped, tag = 'scoped memory for tpu_custom_call.1']
    #allocation5 [shape = 'u8[8192]{0}', space=vmem, size = 0x2000, scoped, tag = 'input window, operand 1, single buffered']
    #allocation6 [shape = 's32[1]{0}', space=sflag, size = 0x4, scoped, tag = 'scoped memory for tpu_custom_call.1']
    #allocation7 [shape = 'u8[8192]{0}', space=vmem, size = 0x2000, scoped, tag = 'input window, operand 3, single buffered']
    #allocation8 [shape = 'u8[8192]{0}', space=vmem, size = 0x2000, scoped, tag = 'output window, operand 0, single buffered']
    %12 = vsyncpa [#allocation3], 0
    %13 = vsyncpa [#allocation6], 0
    %14 = vsyncpa [#allocation4], 0
    // Predicated region
    $region2: #{tpu_custom_call.1} parent=1 // pred_check
      _
    $region3: #{tpu_custom_call.1} parent=1 // pred_check_branch
      %16 = sbr.rel (0) target = $region5
    $region4: #{tpu_custom_call.1} parent=1 // pred_region
      %s18 = ssub.s32 256, 256
      %19 = vsyncadd [#allocation3], %s18
      %s20 = sshll.u32 [#allocation2], 4
      %s21 = int_to_ptr.vmem [resolvable:$true] %s20
      %26 = dma.hbm_to_vmem [thread:$0]  %s0, 256, %s21, [#allocation3], 128, 128, 8
    $region5: #{tpu_custom_call.1} parent=1 // pred_fallthru
      _
    // Predicated region
    $region6: #{tpu_custom_call.1} parent=1 // pred_check
      _
    $region7: #{tpu_custom_call.1} parent=1 // pred_check_branch
      %28 = sbr.rel (0) target = $region9
    $region8: #{tpu_custom_call.1} parent=1 // pred_region
      %s30 = ssub.s32 256, 256
      %31 = vsyncadd [#allocation6], %s30
      %s32 = sshll.u32 [#allocation5], 4
      %s33 = int_to_ptr.vmem [resolvable:$true] %s32
      %38 = dma.hbm_to_vmem [thread:$0]  %s1, 256, %s33, [#allocation6], 64, 64, 4
    $region9: #{tpu_custom_call.1} parent=1 // pred_fallthru
      _
    // Predicated region
    $region10: #{tpu_custom_call.1} parent=1 // pred_check
      _
    $region11: #{tpu_custom_call.1} parent=1 // pred_check_branch
      %40 = sbr.rel (0) target = $region13
    $region12: #{tpu_custom_call.1} parent=1 // pred_region
      _
    $region13: #{tpu_custom_call.1} parent=1 // pred_fallthru
      _
    // Predicated region
    $region14: #{tpu_custom_call.1} parent=1 // pred_check
      _
    $region15: #{tpu_custom_call.1} parent=1 // pred_check_branch
      %42 = sbr.rel (0) target = $region17
    $region16: #{tpu_custom_call.1} parent=1 // pred_region
      %s44 = ssub.s32 256, 256
      %45 = vsyncadd [#allocation6], %s44
      %s46 = sshll.u32 [#allocation7], 4
      %s47 = int_to_ptr.vmem [resolvable:$true] %s46
      %52 = dma.hbm_to_vmem [thread:$0]  %s3, 256, %s47, [#allocation6], 64, 64, 4
    $region17: #{tpu_custom_call.1} parent=1 // pred_fallthru
      _
    // Predicated region
    $region18: #{tpu_custom_call.1} parent=1 // pred_check
      _
    $region19: #{tpu_custom_call.1} parent=1 // pred_check_branch
      %54 = sbr.rel (0) target = $region21
    $region20: #{tpu_custom_call.1} parent=1 // pred_region
      _
    $region21: #{tpu_custom_call.1} parent=1 // pred_fallthru
      _
    // Predicated region
    $region22: #{tpu_custom_call.1} parent=1 // pred_check
      _
    $region23: #{tpu_custom_call.1} parent=1 // pred_check_branch
      %56 = sbr.rel (0) target = $region25
    $region24: #{tpu_custom_call.1} parent=1 // pred_region
      _
    $region25: #{tpu_custom_call.1} parent=1 // pred_fallthru
      _
    // Predicated region
    $region26: #{tpu_custom_call.1} parent=1 // pred_check
      _
    $region27: #{tpu_custom_call.1} parent=1 // pred_check_branch
      %58 = sbr.rel (0) target = $region29
    $region28: #{tpu_custom_call.1} parent=1 // pred_region
      _
    $region29: #{tpu_custom_call.1} parent=1 // pred_fallthru
      _
    // Predicated region
    $region30: #{tpu_custom_call.1} parent=1 // pred_check
      _
    $region31: #{tpu_custom_call.1} parent=1 // pred_check_branch
      %60 = sbr.rel (0) target = $region33
    $region32: #{tpu_custom_call.1} parent=1 // pred_region
      %61 = dma.done [#allocation3], 256
    $region33: #{tpu_custom_call.1} parent=1 // pred_fallthru
      _
    // Predicated region
    $region34: #{tpu_custom_call.1} parent=1 // pred_check
      _
    $region35: #{tpu_custom_call.1} parent=1 // pred_check_branch
      %63 = sbr.rel (0) target = $region37
    $region36: #{tpu_custom_call.1} parent=1 // pred_region
      %64 = dma.done [#allocation6], 256
    $region37: #{tpu_custom_call.1} parent=1 // pred_fallthru
      _
    // Predicated region
    $region38: #{tpu_custom_call.1} parent=1 // pred_check
      _
    $region39: #{tpu_custom_call.1} parent=1 // pred_check_branch
      %66 = sbr.rel (0) target = $region41
    $region40: #{tpu_custom_call.1} parent=1 // pred_region
      %67 = dma.done [#allocation6], 256
    $region41: #{tpu_custom_call.1} parent=1 // pred_fallthru
      _
    %v69 = vld [vmem:[#allocation2] sm:$0xff]
    %v70 = vld [vmem:[#allocation2 + $0x8] sm:$0xff]
    %v71 = vpack.c.bf16 %v70, %v69
    %v72 = vld [vmem:[#allocation5] sm:$0xf]
    %v73 = vld [vmem:[#allocation5 + $0x4] sm:$0xf]
    %v74 = vld [vmem:[#allocation5 + $0x8] sm:$0xf]
    %v75 = vld [vmem:[#allocation5 + $0xc] sm:$0xf]
    %v76 = vld [vmem:[%s2] sm:$0x1]
    %v78 = vlaneseq
    %v79 = vshrl.u32 %v78, 7
    %v80 = vsub.s32 0, %v79
    %v81 = vrot.slane %v76, %v80
    %v87 = vunpack.c.l.b16 %v72
    %v88 = vunpack.c.l.b16 %v73
    %v89 = vunpack.c.l.b16 %v74
    %v90 = vunpack.c.l.b16 %v75
    %v91 = vpack.c.b16 %v88, %v87
    %v92 = vpack.c.b16 %v90, %v89
    %vm95 = vcmask 261120
    %v97 = vsel %vm95, %v71, 0
    %99 = vmatprep.subr.bf16.mxu0 0
    %100 = vmatpush1.bf16.msra.mxu0 %v91
    %101 = vmatprep.subr.bf16.mxu0 0
    %102 = vmatpush1.bf16.msra.mxu0 %v92
    %103 = vmatprep.subr.bf16.mxu0 0
    %104 = vmatpush1.bf16.msra.mxu0 0
    %105 = vmatprep.subr.bf16.mxu0 0
    %106 = vmatpush1.bf16.msra.mxu0 0
    %107 = vmatprep.subr.bf16.mxu0 0
    %108 = vmatpush1.bf16.msra.mxu0 0
    %109 = vmatprep.subr.bf16.mxu0 0
    %110 = vmatpush1.bf16.msra.mxu0 0
    %111 = vmatprep.subr.bf16.mxu0 0
    %112 = vmatpush1.bf16.msra.mxu0 0
    %113 = vmatprep.subr.bf16.mxu0 0
    %114 = vmatpush1.bf16.msra.mxu0 0
    %115 = vmatprep.subr.bf16.mxu0 0
    %116 = vmatpush1.bf16.msra.mxu0 0
    %117 = vmatprep.subr.bf16.mxu0 0
    %118 = vmatpush1.bf16.msra.mxu0 0
    %119 = vmatprep.subr.bf16.mxu0 0
    %120 = vmatpush1.bf16.msra.mxu0 0
    %121 = vmatprep.subr.bf16.mxu0 0
    %122 = vmatpush1.bf16.msra.mxu0 0
    %123 = vmatprep.subr.bf16.mxu0 0
    %124 = vmatpush1.bf16.msra.mxu0 0
    %125 = vmatprep.subr.bf16.mxu0 0
    %126 = vmatpush1.bf16.msra.mxu0 0
    %127 = vmatprep.subr.bf16.mxu0 0
    %128 = vmatpush1.bf16.msra.mxu0 0
    %129 = vmatprep.subr.bf16.mxu0 0
    %130 = vmatpush1.bf16.msra.mxu0 0
    %131 = vmatprep.mubr.bf16.mxu0 0
    %132 = vmatmul.mubr.bf16.gmra.mrb[0].mxu0 %v97
    %v133 = vpop.f32.mrb[0].mxu0
    %v134 = vadd.f32 %v81, %v133
    %v135 = vpop.f32.mrb[0].mxu0
    %v136 = vpop.f32.mrb[0].mxu0
    %v137 = vadd.f32 %v81, %v136
    %v138 = vpop.f32.mrb[0].mxu0
    %139 = vdwg.mxu0
    %v140 = vmax.f32 %v134, 0.0
    %v141 = vmax.f32 %v137, 0.0
    %v142 = vmin.f32 %v140, 6.0
    %v143 = vmin.f32 %v141, 6.0
    %v144 = vpack.c.bf16 %v143, %v142
    %v145 = vld [vmem:[#allocation7] sm:$0xf]
    %v146 = vld [vmem:[#allocation7 + $0x4] sm:$0xf]
    %v147 = vld [vmem:[#allocation7 + $0x8] sm:$0xf]
    %v148 = vld [vmem:[#allocation7 + $0xc] sm:$0xf]
    %v149 = vld [vmem:[%s4] sm:$0x1]
    %v151 = vlaneseq
    %v152 = vshrl.u32 %v151, 7
    %v153 = vsub.s32 0, %v152
    %v154 = vrot.slane %v149, %v153
    %v160 = vunpack.c.l.b16 %v145
    %v161 = vunpack.c.l.b16 %v146
    %v162 = vunpack.c.l.b16 %v147
    %v163 = vunpack.c.l.b16 %v148
    %v164 = vpack.c.b16 %v161, %v160
    %v165 = vpack.c.b16 %v163, %v162
    %v169 = vsel %vm95, %v144, 0
    %171 = vmatprep.subr.bf16.mxu0 0
    %172 = vmatpush1.bf16.msra.mxu0 %v164
    %173 = vmatprep.subr.bf16.mxu0 0
    %174 = vmatpush1.bf16.msra.mxu0 %v165
    %175 = vmatprep.subr.bf16.mxu0 0
    %176 = vmatpush1.bf16.msra.mxu0 0
    %177 = vmatprep.subr.bf16.mxu0 0
    %178 = vmatpush1.bf16.msra.mxu0 0
    %179 = vmatprep.subr.bf16.mxu0 0
    %180 = vmatpush1.bf16.msra.mxu0 0
    %181 = vmatprep.subr.bf16.mxu0 0
    %182 = vmatpush1.bf16.msra.mxu0 0
    %183 = vmatprep.subr.bf16.mxu0 0
    %184 = vmatpush1.bf16.msra.mxu0 0
    %185 = vmatprep.subr.bf16.mxu0 0
    %186 = vmatpush1.bf16.msra.mxu0 0
    %187 = vmatprep.subr.bf16.mxu0 0
    %188 = vmatpush1.bf16.msra.mxu0 0
    %189 = vmatprep.subr.bf16.mxu0 0
    %190 = vmatpush1.bf16.msra.mxu0 0
    %191 = vmatprep.subr.bf16.mxu0 0
    %192 = vmatpush1.bf16.msra.mxu0 0
    %193 = vmatprep.subr.bf16.mxu0 0
    %194 = vmatpush1.bf16.msra.mxu0 0
    %195 = vmatprep.subr.bf16.mxu0 0
    %196 = vmatpush1.bf16.msra.mxu0 0
    %197 = vmatprep.subr.bf16.mxu0 0
    %198 = vmatpush1.bf16.msra.mxu0 0
    %199 = vmatprep.subr.bf16.mxu0 0
    %200 = vmatpush1.bf16.msra.mxu0 0
    %201 = vmatprep.subr.bf16.mxu0 0
    %202 = vmatpush1.bf16.msra.mxu0 0
    %203 = vmatprep.mubr.bf16.mxu0 0
    %204 = vmatmul.mubr.bf16.gmra.mrb[0].mxu0 %v169
    %v205 = vpop.f32.mrb[0].mxu0
    %v206 = vadd.f32 %v154, %v205
    %v207 = vpop.f32.mrb[0].mxu0
    %v208 = vpop.f32.mrb[0].mxu0
    %v209 = vadd.f32 %v154, %v208
    %v210 = vpop.f32.mrb[0].mxu0
    %211 = vdwg.mxu0
    %v212 = vmax.f32 %v206, 0.0
    %v213 = vmax.f32 %v209, 0.0
    %v214 = vmin.f32 %v212, 6.0
    %v215 = vmin.f32 %v213, 6.0
    %v216 = vpack.c.bf16 %v215, %v214
    %v217 = vld [vmem:[%s5] sm:$0xf]
    %v218 = vld [vmem:[%s5 + $0x4] sm:$0xf]
    %v219 = vld [vmem:[%s5 + $0x8] sm:$0xf]
    %v220 = vld [vmem:[%s5 + $0xc] sm:$0xf]
    %v221 = vld [vmem:[%s6] sm:$0x1]
    %v223 = vlaneseq
    %v224 = vshrl.u32 %v223, 7
    %v225 = vsub.s32 0, %v224
    %v226 = vrot.slane %v221, %v225
    %v232 = vunpack.c.l.b16 %v217
    %v233 = vunpack.c.l.b16 %v218
    %v234 = vunpack.c.l.b16 %v219
    %v235 = vunpack.c.l.b16 %v220
    %v236 = vpack.c.b16 %v233, %v232
    %v237 = vpack.c.b16 %v235, %v234
    %v241 = vsel %vm95, %v216, 0
    %243 = vmatprep.subr.bf16.mxu0 0
    %244 = vmatpush1.bf16.msra.mxu0 %v236
    %245 = vmatprep.subr.bf16.mxu0 0
    %246 = vmatpush1.bf16.msra.mxu0 %v237
    %247 = vmatprep.subr.bf16.mxu0 0
    %248 = vmatpush1.bf16.msra.mxu0 0
    %249 = vmatprep.subr.bf16.mxu0 0
    %250 = vmatpush1.bf16.msra.mxu0 0
    %251 = vmatprep.subr.bf16.mxu0 0
    %252 = vmatpush1.bf16.msra.mxu0 0
    %253 = vmatprep.subr.bf16.mxu0 0
    %254 = vmatpush1.bf16.msra.mxu0 0
    %255 = vmatprep.subr.bf16.mxu0 0
    %256 = vmatpush1.bf16.msra.mxu0 0
    %257 = vmatprep.subr.bf16.mxu0 0
    %258 = vmatpush1.bf16.msra.mxu0 0
    %259 = vmatprep.subr.bf16.mxu0 0
    %260 = vmatpush1.bf16.msra.mxu0 0
    %261 = vmatprep.subr.bf16.mxu0 0
    %262 = vmatpush1.bf16.msra.mxu0 0
    %263 = vmatprep.subr.bf16.mxu0 0
    %264 = vmatpush1.bf16.msra.mxu0 0
    %265 = vmatprep.subr.bf16.mxu0 0
    %266 = vmatpush1.bf16.msra.mxu0 0
    %267 = vmatprep.subr.bf16.mxu0 0
    %268 = vmatpush1.bf16.msra.mxu0 0
    %269 = vmatprep.subr.bf16.mxu0 0
    %270 = vmatpush1.bf16.msra.mxu0 0
    %271 = vmatprep.subr.bf16.mxu0 0
    %272 = vmatpush1.bf16.msra.mxu0 0
    %273 = vmatprep.subr.bf16.mxu0 0
    %274 = vmatpush1.bf16.msra.mxu0 0
    %275 = vmatprep.mubr.bf16.mxu0 0
    %276 = vmatmul.mubr.bf16.gmra.mrb[0].mxu0 %v241
    %v277 = vpop.f32.mrb[0].mxu0
    %v278 = vadd.f32 %v226, %v277
    %v279 = vpop.f32.mrb[0].mxu0
    %v280 = vpop.f32.mrb[0].mxu0
    %v281 = vadd.f32 %v226, %v280
    %v282 = vpop.f32.mrb[0].mxu0
    %283 = vdwg.mxu0
    %284 = vst [vmem:[#allocation8] sm:$0xff] %v278
    %285 = vst [vmem:[#allocation8 + $0x8] sm:$0xff] %v281
    // Predicated region
    $region42: #{tpu_custom_call.1} parent=1 // pred_check
      _
    $region43: #{tpu_custom_call.1} parent=1 // pred_check_branch
      %287 = sbr.rel (0) target = $region45
    $region44: #{tpu_custom_call.1} parent=1 // pred_region
      %s289 = ssub.s32 256, 256
      %290 = vsyncadd [#allocation4], %s289
      %s291 = sshll.u32 [#allocation8], 4
      %s292 = int_to_ptr.vmem [resolvable:$true] %s291
      %297 = dma.vmem_to_hbm [thread:$0]  %s292, 256, %s7, [#allocation4], 128, 128, 8
    $region45: #{tpu_custom_call.1} parent=1 // pred_fallthru
      _
    // Predicated region
    $region46: #{tpu_custom_call.1} parent=1 // pred_check
      _
    $region47: #{tpu_custom_call.1} parent=1 // pred_check_branch
      %299 = sbr.rel (0) target = $region49
    $region48: #{tpu_custom_call.1} parent=1 // pred_region
      %300 = dma.done [#allocation4], 256
    $region49: #{tpu_custom_call.1} parent=1 // pred_fallthru
      _
    %301 = vsyncpa [#allocation3], 1
    %302 = vsyncpa [#allocation6], 1
    %303 = vsyncpa [#allocation4], 1

</llo_original>
